<compile_context>
chip_gen: v7x
topology: tpu7x:2x2x1
jax: 0.10.0
libtpu: 0.0.40
codegen_flags: <defaults>
</compile_context>

<pallas_src>
import functools

import jax
import jax.numpy as jnp
from jax.experimental import pallas as pl
from jax.experimental.pallas import tpu as pltpu

_MAX_TB = 1024  # max batch-tile rows per grid step (multiple of 8)


def _round_up(x, m):
    return (x + m - 1) // m * m


def _actor_kernel(x_ref, w1_ref, b1_ref, w2_ref, b2_ref, w3_ref, b3_ref, o_ref):
    """One (tb, n_states) batch tile -> (tb, n_actions) softmax probabilities."""
    x = x_ref[...]

    h = jnp.dot(x, w1_ref[...], preferred_element_type=jnp.float32) + b1_ref[...]
    h = jnp.tanh(h)

    h = jnp.dot(h, w2_ref[...], preferred_element_type=jnp.float32) + b2_ref[...]
    h = jnp.tanh(h)

    logits = jnp.dot(h, w3_ref[...], preferred_element_type=jnp.float32) + b3_ref[...]

    # Numerically-stable softmax over the real (unpadded) action axis.
    m = jnp.max(logits, axis=-1, keepdims=True)
    e = jnp.exp(logits - m)
    denom = jnp.sum(e, axis=-1, keepdims=True)
    o_ref[...] = (e / denom).astype(o_ref.dtype)  # exact divide -> rows sum to 1


def _choose_tb(batch):
    """Batch-tile rows: multiple of 8, <= _MAX_TB, and >= 2 grid steps for any
    batch larger than one minimal tile so the 'parallel' axis can shard across
    both v7x TensorCores."""
    if batch <= 8:
        return 8
    half = -(-batch // 2)  # ceil(batch / 2)
    return min(_round_up(half, 8), _MAX_TB)


def _reference_forward(x, params):
    """Pure-XLA reference (also used as the tiny-batch fast path)."""
    w1, b1, w2, b2, w3, b3 = params
    h = jnp.tanh(x @ w1 + b1)
    h = jnp.tanh(h @ w2 + b2)
    logits = h @ w3 + b3
    return jax.nn.softmax(logits, axis=-1)


@functools.partial(jax.jit, static_argnames=("softmax_dim", "xla_small_batch"))
def actor_forward(x, params, softmax_dim=1, xla_small_batch=0):
    """Pallas version of Actor.forward(x, softmax_dim).

    x: (B, n_states) float32 with softmax_dim in {1, -1}, or (n_states,) with
    softmax_dim in {0, -1}.  xla_small_batch: batches up to this size use a plain
    fused-XLA path (fixed Pallas launch/DMA cost dominates there); 0 disables it.
    """
    w1, b1, w2, b2, w3, b3 = params

    squeeze = False
    if x.ndim == 1:
        if softmax_dim not in (0, -1):
            raise NotImplementedError("1-D input requires softmax_dim in {0, -1}")
        x = x[None, :]
        squeeze = True
    elif x.ndim == 2:
        if softmax_dim not in (1, -1):
            raise NotImplementedError("2-D input requires softmax_dim in {1, -1}")
    else:
        raise NotImplementedError("only 1-D or 2-D inputs are supported")

    B, n_states = x.shape
    hidden = w1.shape[1]
    n_actions = w3.shape[1]

    # Tiny-batch fast path: a fused XLA MLP beats the Pallas fixed overhead here.
    if B <= xla_small_batch:
        out = _reference_forward(x, params)
        return out[0] if squeeze else out

    tb = _choose_tb(B)
    grid = (pl.cdiv(B, tb),)  # ragged last tile handled by Pallas (no x pad)

    out = pl.pallas_call(
        _actor_kernel,
        out_shape=jax.ShapeDtypeStruct((B, n_actions), jnp.float32),
        grid=grid,
        in_specs=[
            pl.BlockSpec((tb, n_states), lambda i: (i, 0)),      # batch-tiled input
            pl.BlockSpec((n_states, hidden), lambda i: (0, 0)),  # VMEM-resident weights
            pl.BlockSpec((1, hidden), lambda i: (0, 0)),
            pl.BlockSpec((hidden, hidden), lambda i: (0, 0)),
            pl.BlockSpec((1, hidden), lambda i: (0, 0)),
            pl.BlockSpec((hidden, n_actions), lambda i: (0, 0)),
            pl.BlockSpec((1, n_actions), lambda i: (0, 0)),
        ],
        out_specs=pl.BlockSpec((tb, n_actions), lambda i: (i, 0)),
        compiler_params=pltpu.CompilerParams(
            dimension_semantics=("parallel",),  # megacore-shard batch axis on v7x
        ),
    )(x, w1, b1, w2, b2, w3, b3)

    return out[0] if squeeze else out


def init_actor_params(key, n_states, n_actions, hidden_dim):
    """Deterministic init mimicking torch.nn.Linear default (U[-1/sqrt(fan_in), +1/sqrt(fan_in)])."""
    def linear(k, fan_in, fan_out):
        kw, kb = jax.random.split(k)
        bound = 1.0 / jnp.sqrt(jnp.float32(fan_in))
        w = jax.random.uniform(kw, (fan_in, fan_out), jnp.float32, -bound, bound)
        b = jax.random.uniform(kb, (1, fan_out), jnp.float32, -bound, bound)
        return w, b

    k1, k2, k3 = jax.random.split(key, 3)
    w1, b1 = linear(k1, n_states, hidden_dim)
    w2, b2 = linear(k2, hidden_dim, hidden_dim)
    w3, b3 = linear(k3, hidden_dim, n_actions)
    return (w1, b1, w2, b2, w3, b3)


if __name__ == "__main__":
    key = jax.random.PRNGKey(0)
    k_param, k_x1, k_x2, k_x3 = jax.random.split(key, 4)

    n_states, n_actions, hidden_dim = 4, 6, 32
    params = init_actor_params(k_param, n_states, n_actions, hidden_dim)

    # 1) Small RL-style batch (single grid step) through the Pallas path.
    x_small = jax.random.normal(k_x1, (8, n_states), jnp.float32)
    probs_small = jax.block_until_ready(actor_forward(x_small, params, softmax_dim=1))
    ref_small = _reference_forward(x_small, params)
    assert probs_small.shape == (8, n_actions)
    assert jnp.allclose(jnp.sum(probs_small, axis=-1), 1.0, atol=1e-4)
    assert jnp.allclose(probs_small, ref_small, atol=2e-3, rtol=2e-3)

    # 2) Large, non-multiple-of-tile batch: exercises the two-step grid
    #    (megacore-shardable) and the ragged last tile (no wrapper pad/slice).
    x_big = jax.random.normal(k_x2, (1000, n_states), jnp.float32)
    probs_big = jax.block_until_ready(actor_forward(x_big, params, softmax_dim=1))
    ref_big = _reference_forward(x_big, params)
    assert probs_big.shape == (1000, n_actions)
    assert jnp.allclose(jnp.sum(probs_big, axis=-1), 1.0, atol=1e-4)
    assert jnp.allclose(probs_big, ref_big, atol=2e-3, rtol=2e-3)

    # 3) Single 1-D state with softmax_dim=0 (typical PPO action selection).
    x_one = jax.random.normal(k_x3, (n_states,), jnp.float32)
    probs_one = jax.block_until_ready(actor_forward(x_one, params, softmax_dim=0))
    assert probs_one.shape == (n_actions,)
    assert jnp.allclose(jnp.sum(probs_one), 1.0, atol=1e-4)
    assert jnp.allclose(probs_one, _reference_forward(x_one[None, :], params)[0],
                        atol=2e-3, rtol=2e-3)

    # 4) Tiny-batch XLA fast path (review item): identical semantics.
    probs_fast = jax.block_until_ready(
        actor_forward(x_small, params, softmax_dim=1, xla_small_batch=32))
    assert jnp.allclose(probs_fast, ref_small, atol=2e-3, rtol=2e-3)

    print("KERNEL_OK")
</pallas_src>

<mosaic_0001>
module attributes {stable_mosaic.version = 11 : i64} {
  func.func @_actor_kernel(%arg0: i32, %arg1: memref<8x4xf32, #tpu.memory_space<vmem>>, %arg2: memref<4x32xf32, #tpu.memory_space<vmem>>, %arg3: memref<1x32xf32, #tpu.memory_space<vmem>>, %arg4: memref<32x32xf32, #tpu.memory_space<vmem>>, %arg5: memref<1x32xf32, #tpu.memory_space<vmem>>, %arg6: memref<32x6xf32, #tpu.memory_space<vmem>>, %arg7: memref<1x6xf32, #tpu.memory_space<vmem>>, %arg8: memref<8x6xf32, #tpu.memory_space<vmem>>) attributes {dimension_semantics = [#tpu.dimension_semantics<parallel>], iteration_bounds = array<i64: 1>, scalar_prefetch = 0 : i64, scratch_operands = 0 : i64, tpu.core_type = #tpu.core_type<tc>, window_params = [{transform_indices = @transform_0, window_bounds = array<i64: 8, 4>}, {pipeline_mode = #tpu.pipeline_mode<synchronous>, transform_indices = @transform_1, window_bounds = array<i64: 4, 32>}, {pipeline_mode = #tpu.pipeline_mode<synchronous>, transform_indices = @transform_2, window_bounds = array<i64: 1, 32>}, {pipeline_mode = #tpu.pipeline_mode<synchronous>, transform_indices = @transform_3, window_bounds = array<i64: 32, 32>}, {pipeline_mode = #tpu.pipeline_mode<synchronous>, transform_indices = @transform_4, window_bounds = array<i64: 1, 32>}, {pipeline_mode = #tpu.pipeline_mode<synchronous>, transform_indices = @transform_5, window_bounds = array<i64: 32, 6>}, {pipeline_mode = #tpu.pipeline_mode<synchronous>, transform_indices = @transform_6, window_bounds = array<i64: 1, 6>}, {transform_indices = @transform_7, window_bounds = array<i64: 8, 6>}]} {
    %c0 = arith.constant 0 : index
    %c0_0 = arith.constant 0 : index
    %0 = vector.load %arg1[%c0, %c0_0] : memref<8x4xf32, #tpu.memory_space<vmem>>, vector<8x4xf32>
    %c0_1 = arith.constant 0 : index
    %c0_2 = arith.constant 0 : index
    %1 = vector.load %arg2[%c0_1, %c0_2] : memref<4x32xf32, #tpu.memory_space<vmem>>, vector<4x32xf32>
    %cst = arith.constant dense<0.000000e+00> : vector<8x32xf32>
    %2 = tpu.matmul %0, %1, %cst {dimension_numbers = #tpu.dot_dimension_numbers<[1], [0], [0], [1], [0, 0, 1, 1], [], []>} : vector<8x4xf32>, vector<4x32xf32>, vector<8x32xf32> -> vector<8x32xf32>
    %c0_3 = arith.constant 0 : index
    %c0_4 = arith.constant 0 : index
    %3 = vector.load %arg3[%c0_3, %c0_4] : memref<1x32xf32, #tpu.memory_space<vmem>>, vector<1x32xf32>
    %4 = vector.broadcast %3 : vector<1x32xf32> to vector<8x32xf32>
    %5 = arith.addf %2, %4 : vector<8x32xf32>
    %6 = math.tanh %5 : vector<8x32xf32>
    %c0_5 = arith.constant 0 : index
    %c0_6 = arith.constant 0 : index
    %7 = vector.load %arg4[%c0_5, %c0_6] : memref<32x32xf32, #tpu.memory_space<vmem>>, vector<32x32xf32>
    %cst_7 = arith.constant dense<0.000000e+00> : vector<8x32xf32>
    %8 = tpu.matmul %6, %7, %cst_7 {dimension_numbers = #tpu.dot_dimension_numbers<[1], [0], [0], [1], [0, 0, 1, 1], [], []>} : vector<8x32xf32>, vector<32x32xf32>, vector<8x32xf32> -> vector<8x32xf32>
    %c0_8 = arith.constant 0 : index
    %c0_9 = arith.constant 0 : index
    %9 = vector.load %arg5[%c0_8, %c0_9] : memref<1x32xf32, #tpu.memory_space<vmem>>, vector<1x32xf32>
    %10 = vector.broadcast %9 : vector<1x32xf32> to vector<8x32xf32>
    %11 = arith.addf %8, %10 : vector<8x32xf32>
    %12 = math.tanh %11 : vector<8x32xf32>
    %c0_10 = arith.constant 0 : index
    %c0_11 = arith.constant 0 : index
    %13 = vector.load %arg6[%c0_10, %c0_11] : memref<32x6xf32, #tpu.memory_space<vmem>>, vector<32x6xf32>
    %cst_12 = arith.constant dense<0.000000e+00> : vector<8x6xf32>
    %14 = tpu.matmul %12, %13, %cst_12 {dimension_numbers = #tpu.dot_dimension_numbers<[1], [0], [0], [1], [0, 0, 1, 1], [], []>} : vector<8x32xf32>, vector<32x6xf32>, vector<8x6xf32> -> vector<8x6xf32>
    %c0_13 = arith.constant 0 : index
    %c0_14 = arith.constant 0 : index
    %15 = vector.load %arg7[%c0_13, %c0_14] : memref<1x6xf32, #tpu.memory_space<vmem>>, vector<1x6xf32>
    %16 = vector.broadcast %15 : vector<1x6xf32> to vector<8x6xf32>
    %17 = arith.addf %14, %16 : vector<8x6xf32>
    %cst_15 = arith.constant dense<0xFF800000> : vector<8xf32>
    %18 = vector.multi_reduction <maximumf>, %17, %cst_15 [1] : vector<8x6xf32> to vector<8xf32>
    %19 = vector.shape_cast %18 : vector<8xf32> to vector<8x1xf32>
    %20 = vector.broadcast %19 : vector<8x1xf32> to vector<8x6xf32>
    %21 = arith.subf %17, %20 : vector<8x6xf32>
    %22 = math.exp %21 : vector<8x6xf32>
    %cst_16 = arith.constant dense<0.000000e+00> : vector<8xf32>
    %23 = vector.multi_reduction <add>, %22, %cst_16 [1] : vector<8x6xf32> to vector<8xf32>
    %24 = vector.shape_cast %23 : vector<8xf32> to vector<8x1xf32>
    %25 = vector.broadcast %24 : vector<8x1xf32> to vector<8x6xf32>
    %26 = arith.divf %22, %25 : vector<8x6xf32>
    %c0_17 = arith.constant 0 : index
    %c0_18 = arith.constant 0 : index
    %27 = vector.load %arg8[%c0_17, %c0_18] : memref<8x6xf32, #tpu.memory_space<vmem>>, vector<8x6xf32>
    tpu.vector_store %arg8[%c0_17, %c0_18], %26 {strides = array<i32>} : memref<8x6xf32, #tpu.memory_space<vmem>>, vector<8x6xf32>,
    return
  }
  func.func @transform_0(%arg0: i32) -> (i32, i32) {
    %c0_i32 = arith.constant 0 : i32
    %c0_i32_0 = arith.constant 0 : i32
    return %arg0, %c0_i32 : i32, i32
  }
  func.func @transform_1(%arg0: i32) -> (i32, i32) {
    %c0_i32 = arith.constant 0 : i32
    %c0_i32_0 = arith.constant 0 : i32
    %c0_i32_1 = arith.constant 0 : i32
    return %c0_i32, %c0_i32_0 : i32, i32
  }
  func.func @transform_2(%arg0: i32) -> (i32, i32) {
    %c0_i32 = arith.constant 0 : i32
    %c0_i32_0 = arith.constant 0 : i32
    %c0_i32_1 = arith.constant 0 : i32
    return %c0_i32, %c0_i32_0 : i32, i32
  }
  func.func @transform_3(%arg0: i32) -> (i32, i32) {
    %c0_i32 = arith.constant 0 : i32
    %c0_i32_0 = arith.constant 0 : i32
    %c0_i32_1 = arith.constant 0 : i32
    return %c0_i32, %c0_i32_0 : i32, i32
  }
  func.func @transform_4(%arg0: i32) -> (i32, i32) {
    %c0_i32 = arith.constant 0 : i32
    %c0_i32_0 = arith.constant 0 : i32
    %c0_i32_1 = arith.constant 0 : i32
    return %c0_i32, %c0_i32_0 : i32, i32
  }
  func.func @transform_5(%arg0: i32) -> (i32, i32) {
    %c0_i32 = arith.constant 0 : i32
    %c0_i32_0 = arith.constant 0 : i32
    %c0_i32_1 = arith.constant 0 : i32
    return %c0_i32, %c0_i32_0 : i32, i32
  }
  func.func @transform_6(%arg0: i32) -> (i32, i32) {
    %c0_i32 = arith.constant 0 : i32
    %c0_i32_0 = arith.constant 0 : i32
    %c0_i32_1 = arith.constant 0 : i32
    return %c0_i32, %c0_i32_0 : i32, i32
  }
  func.func @transform_7(%arg0: i32) -> (i32, i32) {
    %c0_i32 = arith.constant 0 : i32
    %c0_i32_0 = arith.constant 0 : i32
    return %arg0, %c0_i32 : i32, i32
  }
}

</mosaic_0001>

<llo_original>
// kernel: actor_forward.1
$region0: #{actor_forward.1}
  #allocation0 [shape = 'u32[]', space=smem, size = 0x4, offset = 0x4, fixed_abs, tag = 'smem constant byte address 0x4 - core index']
  #allocation1 [shape = 'u32[144,128]{1,0:T(1,128)}', space=vmem, size = 0x12000, scoped, tag = 'internal scratch']
  %s0 = inlined_call_operand.vmem [shape: f32[8,4], index: 0, kind: input, shape index: {}]
  %s1 = inlined_call_operand.vmem [shape: f32[4,32], index: 1, kind: input, shape index: {}]
  %s2 = inlined_call_operand.vmem [shape: f32[1,32], index: 2, kind: input, shape index: {}]
  %s3 = inlined_call_operand.vmem [shape: f32[32,32], index: 3, kind: input, shape index: {}]
  %s4 = inlined_call_operand.vmem [shape: f32[1,32], index: 4, kind: input, shape index: {}]
  %s5 = inlined_call_operand.vmem [shape: f32[32,6], index: 5, kind: input, shape index: {}]
  %s6 = inlined_call_operand.vmem [shape: f32[1,6], index: 6, kind: input, shape index: {}]
  %s7 = inlined_call_operand.hbm [shape: f32[8,6], index: 7, kind: output, shape index: {}]
  %s8 = sld [smem:[#allocation0]]
  $region38: #{actor_forward.1} parent=0
    _
  %s10 = ssub.s32 1, %s8
  %s11 = scalar_select 0, %s10, %s8
  $region1: #{actor_forward.1} parent=0
    #allocation2 [shape = 'u8[4096]{0}', space=vmem, size = 0x1000, scoped, tag = 'output window, operand 0, single buffered']
    #allocation3 [shape = 's32[1]{0}', space=sflag, size = 0x4, scoped, tag = 'scoped memory for actor_forward.1']
    %12 = vsyncpa [#allocation3], 0
    // Predicated region
    $region2: #{actor_forward.1} parent=1 // pred_check
      _
    $region3: #{actor_forward.1} parent=1 // pred_check_branch
      %14 = sbr.rel (0) target = $region5
    $region4: #{actor_forward.1} parent=1 // pred_region
      _
    $region5: #{actor_forward.1} parent=1 // pred_fallthru
      _
    // Predicated region
    $region6: #{actor_forward.1} parent=1 // pred_check
      _
    $region7: #{actor_forward.1} parent=1 // pred_check_branch
      %16 = sbr.rel (0) target = $region9
    $region8: #{actor_forward.1} parent=1 // pred_region
      _
    $region9: #{actor_forward.1} parent=1 // pred_fallthru
      _
    // Predicated region
    $region10: #{actor_forward.1} parent=1 // pred_check
      _
    $region11: #{actor_forward.1} parent=1 // pred_check_branch
      %18 = sbr.rel (0) target = $region13
    $region12: #{actor_forward.1} parent=1 // pred_region
      _
    $region13: #{actor_forward.1} parent=1 // pred_fallthru
      _
    // Predicated region
    $region14: #{actor_forward.1} parent=1 // pred_check
      _
    $region15: #{actor_forward.1} parent=1 // pred_check_branch
      %20 = sbr.rel (0) target = $region17
    $region16: #{actor_forward.1} parent=1 // pred_region
      _
    $region17: #{actor_forward.1} parent=1 // pred_fallthru
      _
    // Predicated region
    $region18: #{actor_forward.1} parent=1 // pred_check
      _
    $region19: #{actor_forward.1} parent=1 // pred_check_branch
      %22 = sbr.rel (0) target = $region21
    $region20: #{actor_forward.1} parent=1 // pred_region
      _
    $region21: #{actor_forward.1} parent=1 // pred_fallthru
      _
    // Predicated region
    $region22: #{actor_forward.1} parent=1 // pred_check
      _
    $region23: #{actor_forward.1} parent=1 // pred_check_branch
      %24 = sbr.rel (0) target = $region25
    $region24: #{actor_forward.1} parent=1 // pred_region
      _
    $region25: #{actor_forward.1} parent=1 // pred_fallthru
      _
    // Predicated region
    $region26: #{actor_forward.1} parent=1 // pred_check
      _
    $region27: #{actor_forward.1} parent=1 // pred_check_branch
      %26 = sbr.rel (0) target = $region29
    $region28: #{actor_forward.1} parent=1 // pred_region
      _
    $region29: #{actor_forward.1} parent=1 // pred_fallthru
      _
    %v27 = vld [vmem:[%s0] sm:$0xff]
    %v28 = vld [vmem:[%s1] sm:$0xf]
    %v29 = vld [vmem:[%s2] sm:$0x1]
    %v31 = vlaneseq
    %v32 = vshrl.u32 %v31, 7
    %v33 = vsub.s32 0, %v32
    %v34 = vrot.slane %v29, %v33
    %vm36 = vcmask 31744
    %v38 = vsel %vm36, %v27, 0
    %vm40 = vcmask 1043456
    %v42 = vsel %vm40, %v28, 0
    %44 = vmatprep.subr.mxu0 0.0
    %45 = vmatpush1.msra.mxu0 %v42
    %46 = vmatprep.subr.mxu0 0.0
    %47 = vmatpush1.msra.mxu0 0.0
    %48 = vmatprep.subr.mxu0 0.0
    %49 = vmatpush1.msra.mxu0 0.0
    %50 = vmatprep.subr.mxu0 0.0
    %51 = vmatpush1.msra.mxu0 0.0
    %52 = vmatprep.subr.mxu0 0.0
    %53 = vmatpush1.msra.mxu0 0.0
    %54 = vmatprep.subr.mxu0 0.0
    %55 = vmatpush1.msra.mxu0 0.0
    %56 = vmatprep.subr.mxu0 0.0
    %57 = vmatpush1.msra.mxu0 0.0
    %58 = vmatprep.subr.mxu0 0.0
    %59 = vmatpush1.msra.mxu0 0.0
    %60 = vmatprep.subr.mxu0 0.0
    %61 = vmatpush1.msra.mxu0 0.0
    %62 = vmatprep.subr.mxu0 0.0
    %63 = vmatpush1.msra.mxu0 0.0
    %64 = vmatprep.subr.mxu0 0.0
    %65 = vmatpush1.msra.mxu0 0.0
    %66 = vmatprep.subr.mxu0 0.0
    %67 = vmatpush1.msra.mxu0 0.0
    %68 = vmatprep.subr.mxu0 0.0
    %69 = vmatpush1.msra.mxu0 0.0
    %70 = vmatprep.subr.mxu0 0.0
    %71 = vmatpush1.msra.mxu0 0.0
    %72 = vmatprep.subr.mxu0 0.0
    %73 = vmatpush1.msra.mxu0 0.0
    %74 = vmatprep.subr.mxu0 0.0
    %75 = vmatpush1.msra.mxu0 0.0
    %76 = vmatprep.subr.mxu0 0.0
    %77 = vmatpush1.msra.mxu0 0.0
    %78 = vmatprep.subr.mxu0 0.0
    %79 = vmatpush1.msra.mxu0 0.0
    %80 = vmatprep.subr.mxu0 0.0
    %81 = vmatpush1.msra.mxu0 0.0
    %82 = vmatprep.subr.mxu0 0.0
    %83 = vmatpush1.msra.mxu0 0.0
    %84 = vmatprep.subr.mxu0 0.0
    %85 = vmatpush1.msra.mxu0 0.0
    %86 = vmatprep.subr.mxu0 0.0
    %87 = vmatpush1.msra.mxu0 0.0
    %88 = vmatprep.subr.mxu0 0.0
    %89 = vmatpush1.msra.mxu0 0.0
    %90 = vmatprep.subr.mxu0 0.0
    %91 = vmatpush1.msra.mxu0 0.0
    %92 = vmatprep.subr.mxu0 0.0
    %93 = vmatpush1.msra.mxu0 0.0
    %94 = vmatprep.subr.mxu0 0.0
    %95 = vmatpush1.msra.mxu0 0.0
    %96 = vmatprep.subr.mxu0 0.0
    %97 = vmatpush1.msra.mxu0 0.0
    %98 = vmatprep.subr.mxu0 0.0
    %99 = vmatpush1.msra.mxu0 0.0
    %100 = vmatprep.subr.mxu0 0.0
    %101 = vmatpush1.msra.mxu0 0.0
    %102 = vmatprep.subr.mxu0 0.0
    %103 = vmatpush1.msra.mxu0 0.0
    %104 = vmatprep.subr.mxu0 0.0
    %105 = vmatpush1.msra.mxu0 0.0
    %106 = vmatprep.subr.mxu0 0.0
    %107 = vmatpush1.msra.mxu0 0.0
    %108 = vmatprep.mubr.f32.mxu0 0.0
    %109 = vmatmul.mubr.f32.gmra.mrb[0].mxu0 %v38
    %v110 = vpop.f32.mrb[0].mxu0
    %v111 = vadd.f32 %v34, %v110
    %v112 = vpop.f32.mrb[0].mxu0
    %113 = vdwg.mxu0
    %v114 = vtanh.pop %v111
    %v115 = vld [vmem:[%s3] sm:$0xff]
    %v116 = vld [vmem:[%s3 + $0x8] sm:$0xff]
    %v117 = vld [vmem:[%s3 + $0x10] sm:$0xff]
    %v118 = vld [vmem:[%s3 + $0x18] sm:$0xff]
    %v119 = vld [vmem:[%s4] sm:$0x1]
    %v121 = vlaneseq
    %v122 = vshrl.u32 %v121, 7
    %v123 = vsub.s32 0, %v122
    %v124 = vrot.slane %v119, %v123
    %vm126 = vcmask 261120
    %v128 = vsel %vm126, %v114, 0
    %130 = vmatprep.subr.mxu0 0.0
    %131 = vmatpush1.msra.mxu0 %v115
    %132 = vmatprep.subr.mxu0 0.0
    %133 = vmatpush1.msra.mxu0 %v116
    %134 = vmatprep.subr.mxu0 0.0
    %135 = vmatpush1.msra.mxu0 %v117
    %136 = vmatprep.subr.mxu0 0.0
    %137 = vmatpush1.msra.mxu0 %v118
    %138 = vmatprep.subr.mxu0 0.0
    %139 = vmatpush1.msra.mxu0 0.0
    %140 = vmatprep.subr.mxu0 0.0
    %141 = vmatpush1.msra.mxu0 0.0
    %142 = vmatprep.subr.mxu0 0.0
    %143 = vmatpush1.msra.mxu0 0.0
    %144 = vmatprep.subr.mxu0 0.0
    %145 = vmatpush1.msra.mxu0 0.0
    %146 = vmatprep.subr.mxu0 0.0
    %147 = vmatpush1.msra.mxu0 0.0
    %148 = vmatprep.subr.mxu0 0.0
    %149 = vmatpush1.msra.mxu0 0.0
    %150 = vmatprep.subr.mxu0 0.0
    %151 = vmatpush1.msra.mxu0 0.0
    %152 = vmatprep.subr.mxu0 0.0
    %153 = vmatpush1.msra.mxu0 0.0
    %154 = vmatprep.subr.mxu0 0.0
    %155 = vmatpush1.msra.mxu0 0.0
    %156 = vmatprep.subr.mxu0 0.0
    %157 = vmatpush1.msra.mxu0 0.0
    %158 = vmatprep.subr.mxu0 0.0
    %159 = vmatpush1.msra.mxu0 0.0
    %160 = vmatprep.subr.mxu0 0.0
    %161 = vmatpush1.msra.mxu0 0.0
    %162 = vmatprep.subr.mxu0 0.0
    %163 = vmatpush1.msra.mxu0 0.0
    %164 = vmatprep.subr.mxu0 0.0
    %165 = vmatpush1.msra.mxu0 0.0
    %166 = vmatprep.subr.mxu0 0.0
    %167 = vmatpush1.msra.mxu0 0.0
    %168 = vmatprep.subr.mxu0 0.0
    %169 = vmatpush1.msra.mxu0 0.0
    %170 = vmatprep.subr.mxu0 0.0
    %171 = vmatpush1.msra.mxu0 0.0
    %172 = vmatprep.subr.mxu0 0.0
    %173 = vmatpush1.msra.mxu0 0.0
    %174 = vmatprep.subr.mxu0 0.0
    %175 = vmatpush1.msra.mxu0 0.0
    %176 = vmatprep.subr.mxu0 0.0
    %177 = vmatpush1.msra.mxu0 0.0
    %178 = vmatprep.subr.mxu0 0.0
    %179 = vmatpush1.msra.mxu0 0.0
    %180 = vmatprep.subr.mxu0 0.0
    %181 = vmatpush1.msra.mxu0 0.0
    %182 = vmatprep.subr.mxu0 0.0
    %183 = vmatpush1.msra.mxu0 0.0
    %184 = vmatprep.subr.mxu0 0.0
    %185 = vmatpush1.msra.mxu0 0.0
    %186 = vmatprep.subr.mxu0 0.0
    %187 = vmatpush1.msra.mxu0 0.0
    %188 = vmatprep.subr.mxu0 0.0
    %189 = vmatpush1.msra.mxu0 0.0
    %190 = vmatprep.subr.mxu0 0.0
    %191 = vmatpush1.msra.mxu0 0.0
    %192 = vmatprep.subr.mxu0 0.0
    %193 = vmatpush1.msra.mxu0 0.0
    %194 = vmatprep.mubr.f32.mxu0 0.0
    %195 = vmatmul.mubr.f32.gmra.mrb[0].mxu0 %v128
    %v196 = vpop.f32.mrb[0].mxu0
    %v197 = vadd.f32 %v124, %v196
    %v198 = vpop.f32.mrb[0].mxu0
    %199 = vdwg.mxu0
    %v200 = vtanh.pop %v197
    %v201 = vld [vmem:[%s5] sm:$0xff]
    %v202 = vld [vmem:[%s5 + $0x8] sm:$0xff]
    %v203 = vld [vmem:[%s5 + $0x10] sm:$0xff]
    %v204 = vld [vmem:[%s5 + $0x18] sm:$0xff]
    %v205 = vld [vmem:[%s6] sm:$0x1]
    %v207 = vlaneseq
    %v208 = vshrl.u32 %v207, 7
    %v209 = vsub.s32 0, %v208
    %v210 = vrot.slane %v205, %v209
    %v213 = vsel %vm126, %v200, 0
    %215 = vmatprep.subr.mxu0 0.0
    %216 = vmatpush1.msra.mxu0 %v201
    %217 = vmatprep.subr.mxu0 0.0
    %218 = vmatpush1.msra.mxu0 %v202
    %219 = vmatprep.subr.mxu0 0.0
    %220 = vmatpush1.msra.mxu0 %v203
    %221 = vmatprep.subr.mxu0 0.0
    %222 = vmatpush1.msra.mxu0 %v204
    %223 = vmatprep.subr.mxu0 0.0
    %224 = vmatpush1.msra.mxu0 0.0
    %225 = vmatprep.subr.mxu0 0.0
    %226 = vmatpush1.msra.mxu0 0.0
    %227 = vmatprep.subr.mxu0 0.0
    %228 = vmatpush1.msra.mxu0 0.0
    %229 = vmatprep.subr.mxu0 0.0
    %230 = vmatpush1.msra.mxu0 0.0
    %231 = vmatprep.subr.mxu0 0.0
    %232 = vmatpush1.msra.mxu0 0.0
    %233 = vmatprep.subr.mxu0 0.0
    %234 = vmatpush1.msra.mxu0 0.0
    %235 = vmatprep.subr.mxu0 0.0
    %236 = vmatpush1.msra.mxu0 0.0
    %237 = vmatprep.subr.mxu0 0.0
    %238 = vmatpush1.msra.mxu0 0.0
    %239 = vmatprep.subr.mxu0 0.0
    %240 = vmatpush1.msra.mxu0 0.0
    %241 = vmatprep.subr.mxu0 0.0
    %242 = vmatpush1.msra.mxu0 0.0
    %243 = vmatprep.subr.mxu0 0.0
    %244 = vmatpush1.msra.mxu0 0.0
    %245 = vmatprep.subr.mxu0 0.0
    %246 = vmatpush1.msra.mxu0 0.0
    %247 = vmatprep.subr.mxu0 0.0
    %248 = vmatpush1.msra.mxu0 0.0
    %249 = vmatprep.subr.mxu0 0.0
    %250 = vmatpush1.msra.mxu0 0.0
    %251 = vmatprep.subr.mxu0 0.0
    %252 = vmatpush1.msra.mxu0 0.0
    %253 = vmatprep.subr.mxu0 0.0
    %254 = vmatpush1.msra.mxu0 0.0
    %255 = vmatprep.subr.mxu0 0.0
    %256 = vmatpush1.msra.mxu0 0.0
    %257 = vmatprep.subr.mxu0 0.0
    %258 = vmatpush1.msra.mxu0 0.0
    %259 = vmatprep.subr.mxu0 0.0
    %260 = vmatpush1.msra.mxu0 0.0
    %261 = vmatprep.subr.mxu0 0.0
    %262 = vmatpush1.msra.mxu0 0.0
    %263 = vmatprep.subr.mxu0 0.0
    %264 = vmatpush1.msra.mxu0 0.0
    %265 = vmatprep.subr.mxu0 0.0
    %266 = vmatpush1.msra.mxu0 0.0
    %267 = vmatprep.subr.mxu0 0.0
    %268 = vmatpush1.msra.mxu0 0.0
    %269 = vmatprep.subr.mxu0 0.0
    %270 = vmatpush1.msra.mxu0 0.0
    %271 = vmatprep.subr.mxu0 0.0
    %272 = vmatpush1.msra.mxu0 0.0
    %273 = vmatprep.subr.mxu0 0.0
    %274 = vmatpush1.msra.mxu0 0.0
    %275 = vmatprep.subr.mxu0 0.0
    %276 = vmatpush1.msra.mxu0 0.0
    %277 = vmatprep.subr.mxu0 0.0
    %278 = vmatpush1.msra.mxu0 0.0
    %279 = vmatprep.mubr.f32.mxu0 0.0
    %280 = vmatmul.mubr.f32.gmra.mrb[0].mxu0 %v213
    %v281 = vpop.f32.mrb[0].mxu0
    %v282 = vadd.f32 %v210, %v281
    %v283 = vpop.f32.mrb[0].mxu0
    %284 = vdwg.mxu0
    %vm285 = vcmask 48128
    %v286 = vsel %vm285, %v282, -inf
    %287 = vmax.xlane.f32.xlu0 %v286
    %v288 = vpop.xlane.xlu0 %287
    %v289 = vsub.f32 %v282, %v288
    %v290 = vmul.f32 %v289, 1.442695
    %v291 = vpow.pop %v290
    %v292 = vsel %vm285, %v291, 0.0
    %293 = vadd.xlane.f32.xlu0 %v292
    %v294 = vpop.xlane.xlu0 %293
    %v295 = vrcp.pop %v294
    %v296 = vmul.f32 %v291, %v295
    %297 = vst.msk [vmem:[#allocation2] sm:$0xff] %vm285, %v296
    // Predicated region
    $region30: #{actor_forward.1} parent=1 // pred_check
      _
    $region31: #{actor_forward.1} parent=1 // pred_check_branch
      %299 = sbr.rel (0) target = $region33
    $region32: #{actor_forward.1} parent=1 // pred_region
      %s301 = ssub.s32 128, 128
      %302 = vsyncadd [#allocation3], %s301
      %s304 = sshll.u32 [#allocation2], 4
      %s305 = int_to_ptr.vmem [resolvable:$true] %s304
      %307 = dma.vmem_to_hbm [thread:$0]  %s305, 128, %s7, [#allocation3]
    $region33: #{actor_forward.1} parent=1 // pred_fallthru
      _
    // Predicated region
    $region34: #{actor_forward.1} parent=1 // pred_check
      _
    $region35: #{actor_forward.1} parent=1 // pred_check_branch
      %309 = sbr.rel (0) target = $region37
    $region36: #{actor_forward.1} parent=1 // pred_region
      %310 = dma.done [#allocation3], 128
    $region37: #{actor_forward.1} parent=1 // pred_fallthru
      _
    %311 = vsyncpa [#allocation3], 1

</llo_original>
